<compile_context>
chip_gen: v6e
topology: v6e:2x2x1
jax: 0.10.0
libtpu: 0.0.40
codegen_flags: <defaults>
</compile_context>

<pallas_src>
import functools

import jax
import jax.numpy as jnp
from jax.experimental import pallas as pl
from jax.experimental.pallas import tpu as pltpu

KERNEL_SIZE = 3          # Folder(kernel_size=3); the module has no learnable parameters.
KK = KERNEL_SIZE * KERNEL_SIZE

# Live (cb, H*W)-sized VMEM slabs per grid step: 2 double-buffered input blocks,
# 2*KK double-buffered output blocks, ~4 in-kernel temporaries (x, x<<1, x>>1, tap).
_SLABS = 2 + 2 * KK + 4


def _round_up(x, m):
    return ((x + m - 1) // m) * m


def _vmem_capacity_bytes():
    """Physical VMEM of the attached TPU (fallback: 64 MiB, the smallest current chip)."""
    try:
        return int(pltpu.get_tpu_info().vmem_capacity_bytes)
    except Exception:
        return 64 << 20


def _choose_block_rows(nc, hw, itemsize, budget_bytes):
    """Rows of the flattened (N*C, H*W) view processed per grid step."""
    sub = max(8, 32 // itemsize)                 # sublane packing: 8 f32, 16 bf16, 32 int8
    per_row = _SLABS * hw * itemsize
    max_cb = max(sub, (budget_bytes // per_row) // sub * sub)
    if nc <= sub:
        return nc                                # block dim == full array dim (allowed)
    # >= 2 and even number of row steps keeps v7x's two TensorCores balanced and lets the
    # in/out DMAs overlap with compute even on single-TC chips; never exceed the budget.
    steps = max(2, pl.cdiv(nc, max_cb))
    if steps % 2:
        steps += 1
    cb = min(_round_up(pl.cdiv(nc, steps), sub), max_cb)
    return max(sub, cb)


def _tap_validity_mask(H, W, dtype):
    """(KK, H*W) mask: 1 where tap k's source pixel lies inside the image, else 0."""
    rows = jnp.arange(H)
    cols = jnp.arange(W)
    row_ok = jnp.stack([rows >= 1, jnp.ones((H,), bool), rows <= H - 2])   # ki = 0, 1, 2
    col_ok = jnp.stack([cols >= 1, jnp.ones((W,), bool), cols <= W - 2])   # kj = 0, 1, 2
    mask = row_ok[:, None, :, None] & col_ok[None, :, None, :]             # (3, 3, H, W)
    return mask.reshape(KK, H * W).astype(dtype)


def _folder_kernel(mask_ref, x_ref, o_ref, *, W, HW):
    """mask_ref: (KK, HW) resident tap mask; x_ref: (cb, HW); o_ref: (cb, KK*HW)."""
    x = x_ref[...]
    zero = jnp.zeros((), dtype=x.dtype)
    # Column offsets dw = -1, 0, +1: the two +-1 lane rotations are shared by all rows.
    cols = (jnp.roll(x, 1, axis=1), x, jnp.roll(x, -1, axis=1))
    for ki in range(KERNEL_SIZE):
        row_roll = -(ki - 1) * W                 # +W (ki=0), 0 (ki=1), -W (ki=2)
        for kj in range(KERNEL_SIZE):
            k = ki * KERNEL_SIZE + kj
            if ki == 1 and kj == 1:              # centre tap: plain copy, no mask needed
                o_ref[:, pl.ds(k * HW, HW)] = x
                continue
            base = cols[kj]
            tap = base if row_roll == 0 else jnp.roll(base, row_roll, axis=1)
            valid = mask_ref[k:k + 1, :] != 0    # (1, HW), broadcasts over the rows
            # Lane offset k*HW: unmasked full-vreg store whenever HW % 128 == 0.
            o_ref[:, pl.ds(k * HW, HW)] = jnp.where(valid, tap, zero)


def folder(x):
    """Pallas equivalent of Folder(kernel_size=3).forward for an NCHW input."""
    N, C, H, W = x.shape
    NC, HW = N * C, H * W
    itemsize = jnp.dtype(x.dtype).itemsize

    cap = _vmem_capacity_bytes()
    budget = max(8 << 20, min(cap // 4, 32 << 20))      # 16 MiB on v7x, 32 MiB on v5e/v6e
    cb = _choose_block_rows(NC, HW, itemsize, budget)
    grid = (pl.cdiv(NC, cb),)

    working_set = _SLABS * cb * HW * itemsize + KK * HW * itemsize
    vmem_limit = int(max(32 << 20, min(working_set + (8 << 20), (3 * cap) // 4)))

    x_flat = x.reshape(NC, HW)                          # free relayout of contiguous NCHW
    mask = _tap_validity_mask(H, W, x.dtype)

    out_flat = pl.pallas_call(
        functools.partial(_folder_kernel, W=W, HW=HW),
        out_shape=jax.ShapeDtypeStruct((NC, KK * HW), x.dtype),
        grid=grid,
        in_specs=[
            pl.BlockSpec((KK, HW), lambda i: (0, 0)),   # mask: DMA'd once, stays resident
            pl.BlockSpec((cb, HW), lambda i: (i, 0)),
        ],
        out_specs=pl.BlockSpec((cb, KK * HW), lambda i: (i, 0)),
        compiler_params=pltpu.CompilerParams(
            dimension_semantics=("parallel",),
            vmem_limit_bytes=vmem_limit),
        cost_estimate=pl.CostEstimate(
            flops=0, transcendentals=0,
            bytes_accessed=(1 + KK) * NC * HW * itemsize + KK * HW * itemsize),
    )(mask, x_flat)

    # (NC, 9*HW) is bit-identical in memory to (N, C*9, H, W): free reshape back.
    return out_flat.reshape(N, C * KK, H, W)


def _folder_reference(x):
    """Pure-JAX reference: F.unfold(k=3, padding=1) followed by view(N, -1, H, W)."""
    N, C, H, W = x.shape
    xp = jnp.pad(x, ((0, 0), (0, 0), (1, 1), (1, 1)))
    taps = [xp[:, :, ki:ki + H, kj:kj + W]
            for ki in range(KERNEL_SIZE) for kj in range(KERNEL_SIZE)]
    return jnp.stack(taps, axis=2).reshape(N, C * KK, H, W)


if __name__ == "__main__":
    key = jax.random.PRNGKey(0)
    N, C, H, W = 2, 4, 16, 16
    x = jax.random.normal(key, (N, C, H, W), dtype=jnp.float32)

    out = jax.block_until_ready(folder(x))
    ref = _folder_reference(x)

    assert out.shape == (N, C * KK, H, W)
    assert jnp.array_equal(out, ref), "mismatch vs reference"
    print("KERNEL_OK")
</pallas_src>

<mosaic_0001>
module attributes {stable_mosaic.version = 11 : i64} {
  func.func @_folder_kernel(%arg0: i32, %arg1: memref<9x256xf32, #tpu.memory_space<vmem>>, %arg2: memref<8x256xf32, #tpu.memory_space<vmem>>, %arg3: memref<8x2304xf32, #tpu.memory_space<vmem>>) attributes {dimension_semantics = [#tpu.dimension_semantics<parallel>], iteration_bounds = array<i64: 1>, scalar_prefetch = 0 : i64, scratch_operands = 0 : i64, tpu.core_type = #tpu.core_type<tc>, window_params = [{pipeline_mode = #tpu.pipeline_mode<synchronous>, transform_indices = @transform_0, window_bounds = array<i64: 9, 256>}, {transform_indices = @transform_1, window_bounds = array<i64: 8, 256>}, {transform_indices = @transform_2, window_bounds = array<i64: 8, 2304>}]} {
    %c0 = arith.constant 0 : index
    %c0_0 = arith.constant 0 : index
    %0 = vector.load %arg2[%c0, %c0_0] : memref<8x256xf32, #tpu.memory_space<vmem>>, vector<8x256xf32>
    %1 = vector.extract_strided_slice %0 {offsets = [0, 255], sizes = [8, 1], strides = [1, 1]} : vector<8x256xf32> to vector<8x1xf32>
    %2 = vector.extract_strided_slice %0 {offsets = [0, 0], sizes = [8, 255], strides = [1, 1]} : vector<8x256xf32> to vector<8x255xf32>
    %3 = tpu.concatenate %1, %2 in 1 : vector<8x1xf32>, vector<8x255xf32> -> vector<8x256xf32>
    %4 = vector.extract_strided_slice %0 {offsets = [0, 1], sizes = [8, 255], strides = [1, 1]} : vector<8x256xf32> to vector<8x255xf32>
    %5 = vector.extract_strided_slice %0 {offsets = [0, 0], sizes = [8, 1], strides = [1, 1]} : vector<8x256xf32> to vector<8x1xf32>
    %6 = tpu.concatenate %4, %5 in 1 : vector<8x255xf32>, vector<8x1xf32> -> vector<8x256xf32>
    %7 = vector.extract_strided_slice %3 {offsets = [0, 240], sizes = [8, 16], strides = [1, 1]} : vector<8x256xf32> to vector<8x16xf32>
    %8 = vector.extract_strided_slice %3 {offsets = [0, 0], sizes = [8, 240], strides = [1, 1]} : vector<8x256xf32> to vector<8x240xf32>
    %9 = tpu.concatenate %7, %8 in 1 : vector<8x16xf32>, vector<8x240xf32> -> vector<8x256xf32>
    %c0_1 = arith.constant 0 : index
    %c0_2 = arith.constant 0 : index
    %10 = vector.load %arg1[%c0_1, %c0_2] : memref<9x256xf32, #tpu.memory_space<vmem>>, vector<1x256xf32>
    %cst = arith.constant 0.000000e+00 : f32
    %11 = vector.broadcast %cst : f32 to vector<1x256xf32>
    %12 = arith.cmpf one, %10, %11 : vector<1x256xf32>
    %cst_3 = arith.constant 0.000000e+00 : f32
    %13 = vector.shape_cast %12 : vector<1x256xi1> to vector<1x256xi1>
    %14 = vector.broadcast %13 : vector<1x256xi1> to vector<8x256xi1>
    %15 = vector.broadcast %cst_3 : f32 to vector<8x256xf32>
    %16 = arith.select %14, %9, %15 : vector<8x256xi1>, vector<8x256xf32>
    %c0_4 = arith.constant 0 : index
    %c0_5 = arith.constant 0 : index
    %17 = vector.load %arg3[%c0_4, %c0_5] : memref<8x2304xf32, #tpu.memory_space<vmem>>, vector<8x256xf32>
    tpu.vector_store %arg3[%c0_4, %c0_5], %16 {strides = array<i32>} : memref<8x2304xf32, #tpu.memory_space<vmem>>, vector<8x256xf32>,
    %18 = vector.extract_strided_slice %0 {offsets = [0, 240], sizes = [8, 16], strides = [1, 1]} : vector<8x256xf32> to vector<8x16xf32>
    %19 = vector.extract_strided_slice %0 {offsets = [0, 0], sizes = [8, 240], strides = [1, 1]} : vector<8x256xf32> to vector<8x240xf32>
    %20 = tpu.concatenate %18, %19 in 1 : vector<8x16xf32>, vector<8x240xf32> -> vector<8x256xf32>
    %c1 = arith.constant 1 : index
    %c0_6 = arith.constant 0 : index
    %21 = vector.load %arg1[%c1, %c0_6] : memref<9x256xf32, #tpu.memory_space<vmem>>, vector<1x256xf32>
    %cst_7 = arith.constant 0.000000e+00 : f32
    %22 = vector.broadcast %cst_7 : f32 to vector<1x256xf32>
    %23 = arith.cmpf one, %21, %22 : vector<1x256xf32>
    %cst_8 = arith.constant 0.000000e+00 : f32
    %24 = vector.shape_cast %23 : vector<1x256xi1> to vector<1x256xi1>
    %25 = vector.broadcast %24 : vector<1x256xi1> to vector<8x256xi1>
    %26 = vector.broadcast %cst_8 : f32 to vector<8x256xf32>
    %27 = arith.select %25, %20, %26 : vector<8x256xi1>, vector<8x256xf32>
    %c0_9 = arith.constant 0 : index
    %c256 = arith.constant 256 : index
    %28 = vector.load %arg3[%c0_9, %c256] : memref<8x2304xf32, #tpu.memory_space<vmem>>, vector<8x256xf32>
    tpu.vector_store %arg3[%c0_9, %c256], %27 {strides = array<i32>} : memref<8x2304xf32, #tpu.memory_space<vmem>>, vector<8x256xf32>,
    %29 = vector.extract_strided_slice %6 {offsets = [0, 240], sizes = [8, 16], strides = [1, 1]} : vector<8x256xf32> to vector<8x16xf32>
    %30 = vector.extract_strided_slice %6 {offsets = [0, 0], sizes = [8, 240], strides = [1, 1]} : vector<8x256xf32> to vector<8x240xf32>
    %31 = tpu.concatenate %29, %30 in 1 : vector<8x16xf32>, vector<8x240xf32> -> vector<8x256xf32>
    %c2 = arith.constant 2 : index
    %c0_10 = arith.constant 0 : index
    %32 = vector.load %arg1[%c2, %c0_10] : memref<9x256xf32, #tpu.memory_space<vmem>>, vector<1x256xf32>
    %cst_11 = arith.constant 0.000000e+00 : f32
    %33 = vector.broadcast %cst_11 : f32 to vector<1x256xf32>
    %34 = arith.cmpf one, %32, %33 : vector<1x256xf32>
    %cst_12 = arith.constant 0.000000e+00 : f32
    %35 = vector.shape_cast %34 : vector<1x256xi1> to vector<1x256xi1>
    %36 = vector.broadcast %35 : vector<1x256xi1> to vector<8x256xi1>
    %37 = vector.broadcast %cst_12 : f32 to vector<8x256xf32>
    %38 = arith.select %36, %31, %37 : vector<8x256xi1>, vector<8x256xf32>
    %c0_13 = arith.constant 0 : index
    %c512 = arith.constant 512 : index
    %39 = vector.load %arg3[%c0_13, %c512] : memref<8x2304xf32, #tpu.memory_space<vmem>>, vector<8x256xf32>
    tpu.vector_store %arg3[%c0_13, %c512], %38 {strides = array<i32>} : memref<8x2304xf32, #tpu.memory_space<vmem>>, vector<8x256xf32>,
    %c3 = arith.constant 3 : index
    %c0_14 = arith.constant 0 : index
    %40 = vector.load %arg1[%c3, %c0_14] : memref<9x256xf32, #tpu.memory_space<vmem>>, vector<1x256xf32>
    %cst_15 = arith.constant 0.000000e+00 : f32
    %41 = vector.broadcast %cst_15 : f32 to vector<1x256xf32>
    %42 = arith.cmpf one, %40, %41 : vector<1x256xf32>
    %cst_16 = arith.constant 0.000000e+00 : f32
    %43 = vector.shape_cast %42 : vector<1x256xi1> to vector<1x256xi1>
    %44 = vector.broadcast %43 : vector<1x256xi1> to vector<8x256xi1>
    %45 = vector.broadcast %cst_16 : f32 to vector<8x256xf32>
    %46 = arith.select %44, %3, %45 : vector<8x256xi1>, vector<8x256xf32>
    %c0_17 = arith.constant 0 : index
    %c768 = arith.constant 768 : index
    %47 = vector.load %arg3[%c0_17, %c768] : memref<8x2304xf32, #tpu.memory_space<vmem>>, vector<8x256xf32>
    tpu.vector_store %arg3[%c0_17, %c768], %46 {strides = array<i32>} : memref<8x2304xf32, #tpu.memory_space<vmem>>, vector<8x256xf32>,
    %c0_18 = arith.constant 0 : index
    %c1024 = arith.constant 1024 : index
    %48 = vector.load %arg3[%c0_18, %c1024] : memref<8x2304xf32, #tpu.memory_space<vmem>>, vector<8x256xf32>
    tpu.vector_store %arg3[%c0_18, %c1024], %0 {strides = array<i32>} : memref<8x2304xf32, #tpu.memory_space<vmem>>, vector<8x256xf32>,
    %c5 = arith.constant 5 : index
    %c0_19 = arith.constant 0 : index
    %49 = vector.load %arg1[%c5, %c0_19] : memref<9x256xf32, #tpu.memory_space<vmem>>, vector<1x256xf32>
    %cst_20 = arith.constant 0.000000e+00 : f32
    %50 = vector.broadcast %cst_20 : f32 to vector<1x256xf32>
    %51 = arith.cmpf one, %49, %50 : vector<1x256xf32>
    %cst_21 = arith.constant 0.000000e+00 : f32
    %52 = vector.shape_cast %51 : vector<1x256xi1> to vector<1x256xi1>
    %53 = vector.broadcast %52 : vector<1x256xi1> to vector<8x256xi1>
    %54 = vector.broadcast %cst_21 : f32 to vector<8x256xf32>
    %55 = arith.select %53, %6, %54 : vector<8x256xi1>, vector<8x256xf32>
    %c0_22 = arith.constant 0 : index
    %c1280 = arith.constant 1280 : index
    %56 = vector.load %arg3[%c0_22, %c1280] : memref<8x2304xf32, #tpu.memory_space<vmem>>, vector<8x256xf32>
    tpu.vector_store %arg3[%c0_22, %c1280], %55 {strides = array<i32>} : memref<8x2304xf32, #tpu.memory_space<vmem>>, vector<8x256xf32>,
    %57 = vector.extract_strided_slice %3 {offsets = [0, 16], sizes = [8, 240], strides = [1, 1]} : vector<8x256xf32> to vector<8x240xf32>
    %58 = vector.extract_strided_slice %3 {offsets = [0, 0], sizes = [8, 16], strides = [1, 1]} : vector<8x256xf32> to vector<8x16xf32>
    %59 = tpu.concatenate %57, %58 in 1 : vector<8x240xf32>, vector<8x16xf32> -> vector<8x256xf32>
    %c6 = arith.constant 6 : index
    %c0_23 = arith.constant 0 : index
    %60 = vector.load %arg1[%c6, %c0_23] : memref<9x256xf32, #tpu.memory_space<vmem>>, vector<1x256xf32>
    %cst_24 = arith.constant 0.000000e+00 : f32
    %61 = vector.broadcast %cst_24 : f32 to vector<1x256xf32>
    %62 = arith.cmpf one, %60, %61 : vector<1x256xf32>
    %cst_25 = arith.constant 0.000000e+00 : f32
    %63 = vector.shape_cast %62 : vector<1x256xi1> to vector<1x256xi1>
    %64 = vector.broadcast %63 : vector<1x256xi1> to vector<8x256xi1>
    %65 = vector.broadcast %cst_25 : f32 to vector<8x256xf32>
    %66 = arith.select %64, %59, %65 : vector<8x256xi1>, vector<8x256xf32>
    %c0_26 = arith.constant 0 : index
    %c1536 = arith.constant 1536 : index
    %67 = vector.load %arg3[%c0_26, %c1536] : memref<8x2304xf32, #tpu.memory_space<vmem>>, vector<8x256xf32>
    tpu.vector_store %arg3[%c0_26, %c1536], %66 {strides = array<i32>} : memref<8x2304xf32, #tpu.memory_space<vmem>>, vector<8x256xf32>,
    %68 = vector.extract_strided_slice %0 {offsets = [0, 16], sizes = [8, 240], strides = [1, 1]} : vector<8x256xf32> to vector<8x240xf32>
    %69 = vector.extract_strided_slice %0 {offsets = [0, 0], sizes = [8, 16], strides = [1, 1]} : vector<8x256xf32> to vector<8x16xf32>
    %70 = tpu.concatenate %68, %69 in 1 : vector<8x240xf32>, vector<8x16xf32> -> vector<8x256xf32>
    %c7 = arith.constant 7 : index
    %c0_27 = arith.constant 0 : index
    %71 = vector.load %arg1[%c7, %c0_27] : memref<9x256xf32, #tpu.memory_space<vmem>>, vector<1x256xf32>
    %cst_28 = arith.constant 0.000000e+00 : f32
    %72 = vector.broadcast %cst_28 : f32 to vector<1x256xf32>
    %73 = arith.cmpf one, %71, %72 : vector<1x256xf32>
    %cst_29 = arith.constant 0.000000e+00 : f32
    %74 = vector.shape_cast %73 : vector<1x256xi1> to vector<1x256xi1>
    %75 = vector.broadcast %74 : vector<1x256xi1> to vector<8x256xi1>
    %76 = vector.broadcast %cst_29 : f32 to vector<8x256xf32>
    %77 = arith.select %75, %70, %76 : vector<8x256xi1>, vector<8x256xf32>
    %c0_30 = arith.constant 0 : index
    %c1792 = arith.constant 1792 : index
    %78 = vector.load %arg3[%c0_30, %c1792] : memref<8x2304xf32, #tpu.memory_space<vmem>>, vector<8x256xf32>
    tpu.vector_store %arg3[%c0_30, %c1792], %77 {strides = array<i32>} : memref<8x2304xf32, #tpu.memory_space<vmem>>, vector<8x256xf32>,
    %79 = vector.extract_strided_slice %6 {offsets = [0, 16], sizes = [8, 240], strides = [1, 1]} : vector<8x256xf32> to vector<8x240xf32>
    %80 = vector.extract_strided_slice %6 {offsets = [0, 0], sizes = [8, 16], strides = [1, 1]} : vector<8x256xf32> to vector<8x16xf32>
    %81 = tpu.concatenate %79, %80 in 1 : vector<8x240xf32>, vector<8x16xf32> -> vector<8x256xf32>
    %c8 = arith.constant 8 : index
    %c0_31 = arith.constant 0 : index
    %82 = vector.load %arg1[%c8, %c0_31] : memref<9x256xf32, #tpu.memory_space<vmem>>, vector<1x256xf32>
    %cst_32 = arith.constant 0.000000e+00 : f32
    %83 = vector.broadcast %cst_32 : f32 to vector<1x256xf32>
    %84 = arith.cmpf one, %82, %83 : vector<1x256xf32>
    %cst_33 = arith.constant 0.000000e+00 : f32
    %85 = vector.shape_cast %84 : vector<1x256xi1> to vector<1x256xi1>
    %86 = vector.broadcast %85 : vector<1x256xi1> to vector<8x256xi1>
    %87 = vector.broadcast %cst_33 : f32 to vector<8x256xf32>
    %88 = arith.select %86, %81, %87 : vector<8x256xi1>, vector<8x256xf32>
    %c0_34 = arith.constant 0 : index
    %c2048 = arith.constant 2048 : index
    %89 = vector.load %arg3[%c0_34, %c2048] : memref<8x2304xf32, #tpu.memory_space<vmem>>, vector<8x256xf32>
    tpu.vector_store %arg3[%c0_34, %c2048], %88 {strides = array<i32>} : memref<8x2304xf32, #tpu.memory_space<vmem>>, vector<8x256xf32>,
    return
  }
  func.func @transform_0(%arg0: i32) -> (i32, i32) {
    %c0_i32 = arith.constant 0 : i32
    %c0_i32_0 = arith.constant 0 : i32
    %c0_i32_1 = arith.constant 0 : i32
    return %c0_i32, %c0_i32_0 : i32, i32
  }
  func.func @transform_1(%arg0: i32) -> (i32, i32) {
    %c0_i32 = arith.constant 0 : i32
    %c0_i32_0 = arith.constant 0 : i32
    return %arg0, %c0_i32 : i32, i32
  }
  func.func @transform_2(%arg0: i32) -> (i32, i32) {
    %c0_i32 = arith.constant 0 : i32
    %c0_i32_0 = arith.constant 0 : i32
    return %arg0, %c0_i32 : i32, i32
  }
}

</mosaic_0001>

<llo_original>
// kernel: tpu_custom_call.1
$region0: #{tpu_custom_call.1}
  #allocation0 [shape = 'u32[]', space=smem, size = 0x4, offset = 0x4, fixed_abs, tag = 'smem constant byte address 0x4 - core index']
  #allocation1 [shape = 'u32[144,128]{1,0:T(1,128)}', space=vmem, size = 0x12000, scoped, tag = 'internal scratch']
  %s0 = inlined_call_operand.hbm [shape: f32[9,256], index: 0, kind: input, shape index: {}]
  %s1 = inlined_call_operand.hbm [shape: f32[8,256], index: 1, kind: input, shape index: {}]
  %s2 = inlined_call_operand.hbm [shape: f32[8,2304], index: 2, kind: output, shape index: {}]
  %s3 = sld [smem:[#allocation0]]
  $region26: #{tpu_custom_call.1} parent=0
    _
  %s5 = ssub.s32 1, %s3
  %s6 = scalar_select 0, %s5, %s3
  $region1: #{tpu_custom_call.1} parent=0
    #allocation2 [shape = 'u8[16384]{0}', space=vmem, size = 0x4000, scoped, tag = 'input window, operand 0, single buffered']
    #allocation3 [shape = 's32[1]{0}', space=sflag, size = 0x4, scoped, tag = 'scoped memory for tpu_custom_call.1']
    #allocation4 [shape = 's32[1]{0}', space=sflag, size = 0x4, scoped, tag = 'scoped memory for tpu_custom_call.1']
    #allocation5 [shape = 'u8[8192]{0}', space=vmem, size = 0x2000, scoped, tag = 'input window, operand 1, single buffered']
    #allocation6 [shape = 's32[1]{0}', space=sflag, size = 0x4, scoped, tag = 'scoped memory for tpu_custom_call.1']
    #allocation7 [shape = 'u8[73728]{0}', space=vmem, size = 0x12000, scoped, tag = 'output window, operand 0, single buffered']
    %7 = vsyncpa [#allocation3], 0
    %8 = vsyncpa [#allocation6], 0
    %9 = vsyncpa [#allocation4], 0
    // Predicated region
    $region2: #{tpu_custom_call.1} parent=1 // pred_check
      _
    $region3: #{tpu_custom_call.1} parent=1 // pred_check_branch
      %11 = sbr.rel (0) target = $region5
    $region4: #{tpu_custom_call.1} parent=1 // pred_region
      %s13 = ssub.s32 512, 512
      %14 = vsyncadd [#allocation3], %s13
      %s15 = sshll.u32 [#allocation2], 4
      %s16 = int_to_ptr.vmem [resolvable:$true] %s15
      %21 = dma.hbm_to_vmem [thread:$0]  %s0, 512, %s16, [#allocation3], 256, 256, 16
    $region5: #{tpu_custom_call.1} parent=1 // pred_fallthru
      _
    // Predicated region
    $region6: #{tpu_custom_call.1} parent=1 // pred_check
      _
    $region7: #{tpu_custom_call.1} parent=1 // pred_check_branch
      %23 = sbr.rel (0) target = $region9
    $region8: #{tpu_custom_call.1} parent=1 // pred_region
      %s25 = ssub.s32 256, 256
      %26 = vsyncadd [#allocation6], %s25
      %s28 = sshll.u32 [#allocation5], 4
      %s29 = int_to_ptr.vmem [resolvable:$true] %s28
      %31 = dma.hbm_to_vmem [thread:$0]  %s1, 256, %s29, [#allocation6]
    $region9: #{tpu_custom_call.1} parent=1 // pred_fallthru
      _
    // Predicated region
    $region10: #{tpu_custom_call.1} parent=1 // pred_check
      _
    $region11: #{tpu_custom_call.1} parent=1 // pred_check_branch
      %33 = sbr.rel (0) target = $region13
    $region12: #{tpu_custom_call.1} parent=1 // pred_region
      %34 = dma.done [#allocation3], 512
    $region13: #{tpu_custom_call.1} parent=1 // pred_fallthru
      _
    // Predicated region
    $region14: #{tpu_custom_call.1} parent=1 // pred_check
      _
    $region15: #{tpu_custom_call.1} parent=1 // pred_check_branch
      %36 = sbr.rel (0) target = $region17
    $region16: #{tpu_custom_call.1} parent=1 // pred_region
      %37 = dma.done [#allocation6], 256
    $region17: #{tpu_custom_call.1} parent=1 // pred_fallthru
      _
    %v38 = vld [vmem:[#allocation5] sm:$0xff]
    %v39 = vld [vmem:[#allocation5 + $0x8] sm:$0xff]
    %41 = vrot.lane.b32.xlu0 %v39, 1
    %v42 = vpop.permute.xlu0 %41
    %45 = vrot.lane.b32.xlu0 %v38, 1
    %v46 = vpop.permute.xlu0 %45
    %vm47 = vcmask 7168
    %v48 = vsel %vm47, %v46, %v42
    %v51 = vsel %vm47, %v42, %v46
    %52 = vrot.lane.b32.xlu0 %v38, 127
    %v53 = vpop.permute.xlu0 %52
    %54 = vrot.lane.b32.xlu0 %v39, 127
    %v55 = vpop.permute.xlu0 %54
    %vm56 = vcmask 1039360
    %v57 = vsel %vm56, %v53, %v55
    %v61 = vsel %vm56, %v55, %v53
    %62 = vrot.lane.b32.xlu0 %v48, 16
    %v63 = vpop.permute.xlu0 %62
    %66 = vrot.lane.b32.xlu0 %v51, 16
    %v67 = vpop.permute.xlu0 %66
    %vm68 = vcmask 130048
    %v69 = vsel %vm68, %v67, %v63
    %v72 = vsel %vm68, %v63, %v67
    %v73 = vld [vmem:[#allocation2] ss:$8 sm:$0x3]
    %vm74 = vcmp.ne.f32.partialorder %v73, 0.0
    %v75 = vsel %vm74, 1, 0
    %v76 = vlaneseq
    %v77 = vshrl.u32 %v76, 7
    %v78 = vsub.s32 0, %v77
    %v79 = vrot.slane %v75, %v78
    %v80 = vlaneseq
    %v81 = vshrl.u32 %v80, 7
    %v82 = vsub.s32 1, %v81
    %v83 = vrot.slane %v75, %v82
    %vm84 = vcmp.eq.s32.totalorder %v79, 1
    %vm85 = vcmp.eq.s32.totalorder %v83, 1
    %v86 = vsel %vm84, %v72, 0.0
    %v87 = vsel %vm85, %v69, 0.0
    %88 = vst [vmem:[#allocation7] sm:$0xff] %v86
    %89 = vst [vmem:[#allocation7 + $0x8] sm:$0xff] %v87
    %90 = vrot.lane.b32.xlu0 %v39, 16
    %v91 = vpop.permute.xlu0 %90
    %93 = vrot.lane.b32.xlu0 %v38, 16
    %v94 = vpop.permute.xlu0 %93
    %v95 = vsel %vm68, %v94, %v91
    %v98 = vsel %vm68, %v91, %v94
    %s99 = scalar_lea.vmem [#allocation2], 1
    %v100 = vld [vmem:[%s99] ss:$8 sm:$0x3]
    %vm101 = vcmp.ne.f32.partialorder %v100, 0.0
    %v102 = vsel %vm101, 1, 0
    %v103 = vlaneseq
    %v104 = vshrl.u32 %v103, 7
    %v105 = vsub.s32 0, %v104
    %v106 = vrot.slane %v102, %v105
    %v107 = vlaneseq
    %v108 = vshrl.u32 %v107, 7
    %v109 = vsub.s32 1, %v108
    %v110 = vrot.slane %v102, %v109
    %vm111 = vcmp.eq.s32.totalorder %v106, 1
    %vm112 = vcmp.eq.s32.totalorder %v110, 1
    %v113 = vsel %vm111, %v98, 0.0
    %v114 = vsel %vm112, %v95, 0.0
    %115 = vst [vmem:[#allocation7 + $0x10] sm:$0xff] %v113
    %116 = vst [vmem:[#allocation7 + $0x18] sm:$0xff] %v114
    %118 = vrot.lane.b32.xlu0 %v61, 16
    %v119 = vpop.permute.xlu0 %118
    %121 = vrot.lane.b32.xlu0 %v57, 16
    %v122 = vpop.permute.xlu0 %121
    %v123 = vsel %vm68, %v122, %v119
    %v126 = vsel %vm68, %v119, %v122
    %s127 = scalar_lea.vmem [#allocation2], 2
    %v128 = vld [vmem:[%s127] ss:$8 sm:$0x3]
    %vm129 = vcmp.ne.f32.partialorder %v128, 0.0
    %v130 = vsel %vm129, 1, 0
    %v131 = vlaneseq
    %v132 = vshrl.u32 %v131, 7
    %v133 = vsub.s32 0, %v132
    %v134 = vrot.slane %v130, %v133
    %v135 = vlaneseq
    %v136 = vshrl.u32 %v135, 7
    %v137 = vsub.s32 1, %v136
    %v138 = vrot.slane %v130, %v137
    %vm139 = vcmp.eq.s32.totalorder %v134, 1
    %vm140 = vcmp.eq.s32.totalorder %v138, 1
    %v141 = vsel %vm139, %v126, 0.0
    %v142 = vsel %vm140, %v123, 0.0
    %143 = vst [vmem:[#allocation7 + $0x20] sm:$0xff] %v141
    %144 = vst [vmem:[#allocation7 + $0x28] sm:$0xff] %v142
    %s145 = scalar_lea.vmem [#allocation2], 3
    %v146 = vld [vmem:[%s145] ss:$8 sm:$0x3]
    %vm147 = vcmp.ne.f32.partialorder %v146, 0.0
    %v148 = vsel %vm147, 1, 0
    %v149 = vlaneseq
    %v150 = vshrl.u32 %v149, 7
    %v151 = vsub.s32 0, %v150
    %v152 = vrot.slane %v148, %v151
    %v153 = vlaneseq
    %v154 = vshrl.u32 %v153, 7
    %v155 = vsub.s32 1, %v154
    %v156 = vrot.slane %v148, %v155
    %vm157 = vcmp.eq.s32.totalorder %v152, 1
    %vm158 = vcmp.eq.s32.totalorder %v156, 1
    %v159 = vsel %vm157, %v51, 0.0
    %v160 = vsel %vm158, %v48, 0.0
    %161 = vst [vmem:[#allocation7 + $0x30] sm:$0xff] %v159
    %162 = vst [vmem:[#allocation7 + $0x38] sm:$0xff] %v160
    %163 = vst [vmem:[#allocation7 + $0x40] sm:$0xff] %v38
    %164 = vst [vmem:[#allocation7 + $0x48] sm:$0xff] %v39
    %s165 = scalar_lea.vmem [#allocation2], 5
    %v166 = vld [vmem:[%s165] ss:$8 sm:$0x3]
    %vm167 = vcmp.ne.f32.partialorder %v166, 0.0
    %v168 = vsel %vm167, 1, 0
    %v169 = vlaneseq
    %v170 = vshrl.u32 %v169, 7
    %v171 = vsub.s32 0, %v170
    %v172 = vrot.slane %v168, %v171
    %v173 = vlaneseq
    %v174 = vshrl.u32 %v173, 7
    %v175 = vsub.s32 1, %v174
    %v176 = vrot.slane %v168, %v175
    %vm177 = vcmp.eq.s32.totalorder %v172, 1
    %vm178 = vcmp.eq.s32.totalorder %v176, 1
    %v179 = vsel %vm177, %v57, 0.0
    %v180 = vsel %vm178, %v61, 0.0
    %181 = vst [vmem:[#allocation7 + $0x50] sm:$0xff] %v179
    %182 = vst [vmem:[#allocation7 + $0x58] sm:$0xff] %v180
    %183 = vrot.lane.b32.xlu0 %v51, 112
    %v184 = vpop.permute.xlu0 %183
    %185 = vrot.lane.b32.xlu0 %v48, 112
    %v186 = vpop.permute.xlu0 %185
    %vm187 = vcmask 916480
    %v188 = vsel %vm187, %v184, %v186
    %v192 = vsel %vm187, %v186, %v184
    %s193 = scalar_lea.vmem [#allocation2], 6
    %v194 = vld [vmem:[%s193] ss:$8 sm:$0x3]
    %vm195 = vcmp.ne.f32.partialorder %v194, 0.0
    %v196 = vsel %vm195, 1, 0
    %v197 = vlaneseq
    %v198 = vshrl.u32 %v197, 7
    %v199 = vsub.s32 0, %v198
    %v200 = vrot.slane %v196, %v199
    %v201 = vlaneseq
    %v202 = vshrl.u32 %v201, 7
    %v203 = vsub.s32 1, %v202
    %v204 = vrot.slane %v196, %v203
    %vm205 = vcmp.eq.s32.totalorder %v200, 1
    %vm206 = vcmp.eq.s32.totalorder %v204, 1
    %v207 = vsel %vm205, %v188, 0.0
    %v208 = vsel %vm206, %v192, 0.0
    %209 = vst [vmem:[#allocation7 + $0x60] sm:$0xff] %v207
    %210 = vst [vmem:[#allocation7 + $0x68] sm:$0xff] %v208
    %211 = vrot.lane.b32.xlu0 %v38, 112
    %v212 = vpop.permute.xlu0 %211
    %213 = vrot.lane.b32.xlu0 %v39, 112
    %v214 = vpop.permute.xlu0 %213
    %v215 = vsel %vm187, %v212, %v214
    %v219 = vsel %vm187, %v214, %v212
    %s220 = scalar_lea.vmem [#allocation2], 7
    %v221 = vld [vmem:[%s220] ss:$8 sm:$0x3]
    %vm222 = vcmp.ne.f32.partialorder %v221, 0.0
    %v223 = vsel %vm222, 1, 0
    %v224 = vlaneseq
    %v225 = vshrl.u32 %v224, 7
    %v226 = vsub.s32 0, %v225
    %v227 = vrot.slane %v223, %v226
    %v228 = vlaneseq
    %v229 = vshrl.u32 %v228, 7
    %v230 = vsub.s32 1, %v229
    %v231 = vrot.slane %v223, %v230
    %vm232 = vcmp.eq.s32.totalorder %v227, 1
    %vm233 = vcmp.eq.s32.totalorder %v231, 1
    %v234 = vsel %vm232, %v215, 0.0
    %v235 = vsel %vm233, %v219, 0.0
    %236 = vst [vmem:[#allocation7 + $0x70] sm:$0xff] %v234
    %237 = vst [vmem:[#allocation7 + $0x78] sm:$0xff] %v235
    %238 = vrot.lane.b32.xlu0 %v57, 112
    %v239 = vpop.permute.xlu0 %238
    %240 = vrot.lane.b32.xlu0 %v61, 112
    %v241 = vpop.permute.xlu0 %240
    %v242 = vsel %vm187, %v239, %v241
    %v246 = vsel %vm187, %v241, %v239
    %s247 = scalar_lea.vmem [#allocation2], 16
    %v248 = vld [vmem:[%s247] ss:$8 sm:$0x3]
    %vm249 = vcmp.ne.f32.partialorder %v248, 0.0
    %v250 = vsel %vm249, 1, 0
    %v251 = vlaneseq
    %v252 = vshrl.u32 %v251, 7
    %v253 = vsub.s32 0, %v252
    %v254 = vrot.slane %v250, %v253
    %v255 = vlaneseq
    %v256 = vshrl.u32 %v255, 7
    %v257 = vsub.s32 1, %v256
    %v258 = vrot.slane %v250, %v257
    %vm259 = vcmp.eq.s32.totalorder %v254, 1
    %vm260 = vcmp.eq.s32.totalorder %v258, 1
    %v261 = vsel %vm259, %v242, 0.0
    %v262 = vsel %vm260, %v246, 0.0
    %263 = vst [vmem:[#allocation7 + $0x80] sm:$0xff] %v261
    %264 = vst [vmem:[#allocation7 + $0x88] sm:$0xff] %v262
    // Predicated region
    $region18: #{tpu_custom_call.1} parent=1 // pred_check
      _
    $region19: #{tpu_custom_call.1} parent=1 // pred_check_branch
      %266 = sbr.rel (0) target = $region21
    $region20: #{tpu_custom_call.1} parent=1 // pred_region
      %s268 = ssub.s32 2304, 2304
      %269 = vsyncadd [#allocation4], %s268
      %s271 = sshll.u32 [#allocation7], 4
      %s272 = int_to_ptr.vmem [resolvable:$true] %s271
      %274 = dma.vmem_to_hbm [thread:$0]  %s272, 2304, %s2, [#allocation4]
    $region21: #{tpu_custom_call.1} parent=1 // pred_fallthru
      _
    // Predicated region
    $region22: #{tpu_custom_call.1} parent=1 // pred_check
      _
    $region23: #{tpu_custom_call.1} parent=1 // pred_check_branch
      %276 = sbr.rel (0) target = $region25
    $region24: #{tpu_custom_call.1} parent=1 // pred_region
      %277 = dma.done [#allocation4], 2304
    $region25: #{tpu_custom_call.1} parent=1 // pred_fallthru
      _
    %278 = vsyncpa [#allocation3], 1
    %279 = vsyncpa [#allocation6], 1
    %280 = vsyncpa [#allocation4], 1

</llo_original>
